<compile_context>
chip_gen: v6e
topology: v6e:2x2x1
jax: 0.10.0
libtpu: 0.0.40
codegen_flags: <defaults>
</compile_context>

<pallas_src>
from functools import partial

import jax
import jax.numpy as jnp
from jax.experimental import pallas as pl
from jax.experimental.pallas import tpu as pltpu

_LANE = 128                               # lane width; tiles are multiples of this
_BLOCK_BUDGET_BYTES = 4 * 1024 * 1024     # per input block; ~4x lives in VMEM
_VMEM_LIMIT_BYTES = 32 * 1024 * 1024      # explicit scoped-VMEM limit, safe on all gens


def _cdiv(a, b):
    return -(-a // b)


def _choose_tiling(N, C, M, itemsize):
    """Pick (images-per-block nb, lane-tile size) for a streaming, mem-bound kernel."""
    col_bytes = max(1, C * _LANE * itemsize)          # bytes of one 128-lane column
    max_cols = max(1, _BLOCK_BUDGET_BYTES // col_bytes)
    cols_needed = _cdiv(M, _LANE)                     # lane columns covering one image

    if cols_needed <= max_cols:
        # Whole image fits along lanes; fold batch images to amortize step overhead.
        tile_cols = cols_needed
        imgs_per_block = max(1, max_cols // cols_needed)
        nb = 1
        for d in range(min(N, imgs_per_block), 0, -1):   # largest divisor of N that fits
            if N % d == 0:
                nb = d
                break
    else:
        tile_cols = max_cols
        nb = 1

    # Keep at least 2 grid steps so v7x's two TensorCores both get work.
    total = (N // nb) * _cdiv(cols_needed, tile_cols)
    if total < 2:
        if nb > 1:
            nb = next(d for d in range(nb - 1, 0, -1) if N % d == 0)
        elif tile_cols > 1:
            tile_cols = _cdiv(tile_cols, 2)

    return nb, tile_cols * _LANE


# --------------------------- Pallas kernel ----------------------------------

def _l2norm_kernel(x_ref, s_ref, o_ref, *, eps):
    """x_ref/o_ref: (nb, C, T) tiles; s_ref: (1, C, 1) f32 rescale factors.

    Channel (sublane) reduce in f32 -> rsqrt on the EUP -> scale -> lane-dense
    store in the input dtype.
    """
    x = x_ref[...].astype(jnp.float32)                    # (nb, C, T)
    ssq = jnp.sum(x * x, axis=1, keepdims=True)           # (nb, 1, T) XLU reduce
    inv = jax.lax.rsqrt(ssq + eps)                        # EUP, no VPU divide
    o_ref[...] = (x * inv * s_ref[...]).astype(o_ref.dtype)


def pallas_l2norm(x, rescale_factors, eps=0.0):
    """x: (N, C, H, W) f32/bf16, rescale_factors: (C,) -> (N, C, H, W) in x.dtype.

    eps defaults to 0.0 to match the PyTorch module exactly (an all-zero pixel
    then yields NaN, like x / 0); pass a tiny eps to make such pixels return 0.
    """
    N, C, H, W = x.shape
    M = H * W
    dtype = x.dtype
    itemsize = jnp.dtype(dtype).itemsize

    xm = x.reshape(N, C, M)                               # free reshape, no transpose
    scale = rescale_factors.reshape(1, C, 1).astype(jnp.float32)

    nb, tile = _choose_tiling(N, C, M, itemsize)
    grid = (N // nb, _cdiv(M, tile))                      # ragged final lane block OK

    out = pl.pallas_call(
        partial(_l2norm_kernel, eps=eps),
        out_shape=jax.ShapeDtypeStruct((N, C, M), dtype),
        grid_spec=pltpu.PrefetchScalarGridSpec(
            num_scalar_prefetch=0,
            grid=grid,
            in_specs=[
                pl.BlockSpec((nb, C, tile), lambda n, m: (n, 0, m)),
                pl.BlockSpec((1, C, 1), lambda n, m: (0, 0, 0)),
            ],
            out_specs=pl.BlockSpec((nb, C, tile), lambda n, m: (n, 0, m)),
        ),
        compiler_params=pltpu.CompilerParams(
            dimension_semantics=("parallel", "parallel"),
            vmem_limit_bytes=_VMEM_LIMIT_BYTES),
        cost_estimate=pl.CostEstimate(
            flops=3 * N * C * M,
            transcendentals=N * M,
            bytes_accessed=2 * N * C * M * itemsize),
    )(xm, scale)

    return out.reshape(N, C, H, W)


# TODO(synk): in the full SSD300 model this L2Norm could be fused into the
# conv4_3 GEMM epilogue; the standalone module has no surrounding GEMM, so it
# is implemented here as a single streaming reduce+scale kernel.


# --------------------------- parameters (module init) -----------------------

def init_l2norm_params(channels, scale):
    """Matches L2Norm.reset_params(): rescale_factors = constant(scale)."""
    return jnp.full((channels,), float(scale), jnp.float32)


# --------------------------- reference + test --------------------------------

def _reference_l2norm(x, rescale_factors):
    norm = jnp.sqrt(jnp.sum(x * x, axis=1, keepdims=True))
    return x / norm * rescale_factors.reshape(1, -1, 1, 1)


if __name__ == "__main__":
    key = jax.random.PRNGKey(0)
    k1, k2 = jax.random.split(key)

    fwd = jax.jit(pallas_l2norm)

    # Case 1: small block, lane-aligned spatial (16*16 = 256 lanes).
    N, C, H, W = 2, 4, 16, 16
    x = jax.random.normal(k1, (N, C, H, W), jnp.float32)
    rescale = init_l2norm_params(C, scale=20.0)
    out = fwd(x, rescale)
    jax.block_until_ready(out)
    ref = _reference_l2norm(x, rescale)
    assert out.shape == (N, C, H, W), out.shape
    assert bool(jnp.all(jnp.isfinite(out)))
    assert float(jnp.max(jnp.abs(out - ref))) < 1e-4

    # Case 2: non-lane-aligned spatial (exercises the ragged final lane block).
    N2, C2, H2, W2 = 2, 4, 7, 9          # M = 63, not a multiple of 128
    x2 = jax.random.normal(k2, (N2, C2, H2, W2), jnp.float32)
    rescale2 = init_l2norm_params(C2, scale=20.0)
    out2 = jax.jit(pallas_l2norm)(x2, rescale2)
    jax.block_until_ready(out2)
    ref2 = _reference_l2norm(x2, rescale2)
    assert out2.shape == (N2, C2, H2, W2), out2.shape
    assert bool(jnp.all(jnp.isfinite(out2)))
    assert float(jnp.max(jnp.abs(out2 - ref2))) < 1e-4

    # Case 3: bf16 activations (halves HBM traffic; math is f32 in-kernel).
    x3 = x.astype(jnp.bfloat16)
    out3 = jax.jit(pallas_l2norm)(x3, rescale)
    jax.block_until_ready(out3)
    ref3 = _reference_l2norm(x3.astype(jnp.float32), rescale)
    assert out3.dtype == jnp.bfloat16
    assert bool(jnp.all(jnp.isfinite(out3.astype(jnp.float32))))
    assert bool(jnp.allclose(out3.astype(jnp.float32), ref3, rtol=2e-2, atol=2e-1))

    print("KERNEL_OK")
</pallas_src>

<mosaic_0001>
module attributes {stable_mosaic.version = 11 : i64} {
  func.func @_l2norm_kernel(%arg0: i32, %arg1: i32, %arg2: memref<1x4x256xf32, #tpu.memory_space<vmem>>, %arg3: memref<1x4x1xf32, #tpu.memory_space<vmem>>, %arg4: memref<1x4x256xf32, #tpu.memory_space<vmem>>) attributes {dimension_semantics = [#tpu.dimension_semantics<parallel>, #tpu.dimension_semantics<parallel>], iteration_bounds = array<i64: 2, 1>, scalar_prefetch = 0 : i64, scratch_operands = 0 : i64, tpu.core_type = #tpu.core_type<tc>, window_params = [{transform_indices = @transform_0, window_bounds = array<i64: 1, 4, 256>}, {pipeline_mode = #tpu.pipeline_mode<synchronous>, transform_indices = @transform_1, window_bounds = array<i64: 1, 4, 1>}, {transform_indices = @transform_2, window_bounds = array<i64: 1, 4, 256>}]} {
    %c0 = arith.constant 0 : index
    %c0_0 = arith.constant 0 : index
    %c0_1 = arith.constant 0 : index
    %0 = vector.load %arg2[%c0, %c0_0, %c0_1] : memref<1x4x256xf32, #tpu.memory_space<vmem>>, vector<1x4x256xf32>
    %1 = arith.mulf %0, %0 : vector<1x4x256xf32>
    %cst = arith.constant dense<0.000000e+00> : vector<1x256xf32>
    %2 = vector.multi_reduction <add>, %1, %cst [1] : vector<1x4x256xf32> to vector<1x256xf32>
    %3 = vector.shape_cast %2 : vector<1x256xf32> to vector<1x1x256xf32>
    %cst_2 = arith.constant 0.000000e+00 : f32
    %4 = vector.broadcast %cst_2 : f32 to vector<1x1x256xf32>
    %5 = arith.addf %3, %4 : vector<1x1x256xf32>
    %6 = math.rsqrt %5 : vector<1x1x256xf32>
    %7 = vector.broadcast %6 : vector<1x1x256xf32> to vector<1x4x256xf32>
    %8 = arith.mulf %0, %7 : vector<1x4x256xf32>
    %c0_3 = arith.constant 0 : index
    %c0_4 = arith.constant 0 : index
    %c0_5 = arith.constant 0 : index
    %9 = vector.load %arg3[%c0_3, %c0_4, %c0_5] : memref<1x4x1xf32, #tpu.memory_space<vmem>>, vector<1x4x1xf32>
    %10 = vector.broadcast %9 : vector<1x4x1xf32> to vector<1x4x256xf32>
    %11 = arith.mulf %8, %10 : vector<1x4x256xf32>
    %c0_6 = arith.constant 0 : index
    %c0_7 = arith.constant 0 : index
    %c0_8 = arith.constant 0 : index
    %12 = vector.load %arg4[%c0_6, %c0_7, %c0_8] : memref<1x4x256xf32, #tpu.memory_space<vmem>>, vector<1x4x256xf32>
    tpu.vector_store %arg4[%c0_6, %c0_7, %c0_8], %11 {strides = array<i32>} : memref<1x4x256xf32, #tpu.memory_space<vmem>>, vector<1x4x256xf32>,
    return
  }
  func.func @transform_0(%arg0: i32, %arg1: i32) -> (i32, i32, i32) {
    %c0_i32 = arith.constant 0 : i32
    %c0_i32_0 = arith.constant 0 : i32
    return %arg0, %c0_i32, %arg1 : i32, i32, i32
  }
  func.func @transform_1(%arg0: i32, %arg1: i32) -> (i32, i32, i32) {
    %c0_i32 = arith.constant 0 : i32
    %c0_i32_0 = arith.constant 0 : i32
    %c0_i32_1 = arith.constant 0 : i32
    %c0_i32_2 = arith.constant 0 : i32
    return %c0_i32, %c0_i32_0, %c0_i32_1 : i32, i32, i32
  }
  func.func @transform_2(%arg0: i32, %arg1: i32) -> (i32, i32, i32) {
    %c0_i32 = arith.constant 0 : i32
    %c0_i32_0 = arith.constant 0 : i32
    return %arg0, %c0_i32, %arg1 : i32, i32, i32
  }
}

</mosaic_0001>

<llo_original>
// kernel: pallas_l2norm.1
$region0: #{pallas_l2norm.1}
  #allocation0 [shape = 'u32[]', space=smem, size = 0x4, offset = 0x4, fixed_abs, tag = 'smem constant byte address 0x4 - core index']
  #allocation1 [shape = 'u32[144,128]{1,0:T(1,128)}', space=vmem, size = 0x12000, scoped, tag = 'internal scratch']
  %s0 = inlined_call_operand.vmem [shape: f32[2,4,256], index: 0, kind: input, shape index: {}]
  %s1 = inlined_call_operand.vmem [shape: f32[1,4,1], index: 1, kind: input, shape index: {}]
  %s2 = inlined_call_operand.vmem [shape: f32[2,4,256], index: 2, kind: output, shape index: {}]
  %s3 = sld [smem:[#allocation0]]
  $region41: #{pallas_l2norm.1} parent=0
    _
  %s5 = ssub.s32 1, %s3
  %s6 = scalar_select 0, %s5, %s3
  loop: start=0, step=1, limit=4
  $region2: #{pallas_l2norm.1} parent=0 // loop_pre_header
    _
  $region3: #{pallas_l2norm.1} parent=0 // loop_header
    %s8 = sphi 0, %s12
    %p9 = scmp.ge.s32.totalorder %s8, 4
    %s15 = sphi 0, %s27
    %s16 = sphi 0, %s23
    %s17 = sphi 0, %s15
    %s18 = sphi 0, %s16
    %s19 = sphi 0, %s17
    %s20 = sphi 0, %s18
    %s32 = sphi 0, %s34
    %s35 = sphi 0, %s32
    %s36 = sphi 0, %s35
    %s52 = sphi 0, %s36
    %s56 = sphi 0, %s56
    %s58 = sphi 0, %s56
    %s59 = sphi 0, %s58
    %s73 = sphi 0, %s59
    %s81 = sphi 0, %s83
    %s84 = sphi 0, %s81
    %s85 = sphi 0, %s84
    %s101 = sphi 0, %s85
  $region4: #{pallas_l2norm.1} parent=0 // loop_header_branch
    %11 = sbr.rel (%p9) target = $region8
  $region5: #{pallas_l2norm.1} parent=0 // loop_body
    %s13 = ssub.s32 %s8, 1
    %s14 = ssub.s32 %s8, 2
    %s21 = sadd.s32 1, %s16
    %p22 = scmp.ge.s32.totalorder %s21, 1
    %s23 = scalar_select %p22, 0, %s21
    %s24 = sadd.s32 1, %s15
    %s25 = scalar_select %p22, %s24, %s15
    %p26 = scmp.ge.s32.totalorder %s25, 2
    %s27 = scalar_select %p26, 0, %s25
    %s28 = ssub.s32 %s15, %s27
    %s29 = ssub.s32 %s16, %s23
    %s30 = sor.u32 %s28, %s29
    %p31 = scmp.eq.s32.totalorder %s30, 0
    %s33 = sadd.s32 %s32, 1
    %s34 = scalar_select %p31, %s32, %s33
    %p37 = pneg %p31
    %p38 = scmp.eq.s32.totalorder %s8, 1
    %p39 = por %p37, %p38
    %p40 = scmp.ne.s32.totalorder %s32, %s35
    %p41 = scmp.eq.s32.totalorder %s8, 0
    %p42 = por %p40, %p41
    %p43 = scmp.ne.s32.totalorder %s32, %s35
    %p44 = scmp.eq.s32.totalorder %s13, 1
    %p45 = por %p43, %p44
    %p46 = scmp.ne.s32.totalorder %s35, %s36
    %p47 = scmp.eq.s32.totalorder %s13, 0
    %p48 = por %p46, %p47
    %p49 = scmp.ne.s32.totalorder %s35, %s36
    %p50 = scmp.eq.s32.totalorder %s14, 1
    %p51 = por %p49, %p50
    %p53 = scmp.ne.s32.totalorder %s36, %s52
    %p54 = scmp.eq.s32.totalorder %s14, 0
    %p55 = por %p53, %p54
    %s57 = sadd.s32 %s56, 1
    %p60 = scmp.eq.s32.totalorder %s8, 1
    %p61 = scmp.ne.s32.totalorder %s56, %s58
    %p62 = scmp.eq.s32.totalorder %s8, 0
    %p63 = por %p61, %p62
    %p64 = scmp.ne.s32.totalorder %s56, %s58
    %p65 = scmp.eq.s32.totalorder %s13, 1
    %p66 = por %p64, %p65
    %p67 = scmp.ne.s32.totalorder %s58, %s59
    %p68 = scmp.eq.s32.totalorder %s13, 0
    %p69 = por %p67, %p68
    %p70 = scmp.ne.s32.totalorder %s58, %s59
    %p71 = scmp.eq.s32.totalorder %s14, 1
    %p72 = por %p70, %p71
    %p74 = scmp.ne.s32.totalorder %s59, %s73
    %p75 = scmp.eq.s32.totalorder %s14, 0
    %p76 = por %p74, %p75
    %s77 = ssub.s32 %s15, %s27
    %s78 = ssub.s32 %s16, %s23
    %s79 = sor.u32 %s77, %s78
    %p80 = scmp.eq.s32.totalorder %s79, 0
    %s82 = sadd.s32 %s81, 1
    %s83 = scalar_select %p80, %s81, %s82
    %p86 = pneg %p80
    %p87 = scmp.eq.s32.totalorder %s8, 1
    %p88 = por %p86, %p87
    %p89 = scmp.ne.s32.totalorder %s81, %s84
    %p90 = scmp.eq.s32.totalorder %s8, 0
    %p91 = por %p89, %p90
    %p92 = scmp.ne.s32.totalorder %s81, %s84
    %p93 = scmp.eq.s32.totalorder %s13, 1
    %p94 = por %p92, %p93
    %p95 = scmp.ne.s32.totalorder %s84, %s85
    %p96 = scmp.eq.s32.totalorder %s13, 0
    %p97 = por %p95, %p96
    %p98 = scmp.ne.s32.totalorder %s84, %s85
    %p99 = scmp.eq.s32.totalorder %s14, 1
    %p100 = por %p98, %p99
    %p102 = scmp.ne.s32.totalorder %s85, %s101
    %p103 = scmp.eq.s32.totalorder %s14, 0
    %p104 = por %p102, %p103
    %p105 = scmp.le.s32.totalorder 1, %s8
    %p106 = scmp.lt.s32.totalorder %s8, 3
    %p107 = pnand %p105, %p106
    %p108 = pneg %p107
    // Predicated region
    $region9: #{pallas_l2norm.1} parent=5 // pred_check
      _
    $region10: #{pallas_l2norm.1} parent=5 // pred_check_branch
      %110 = sbr.rel (%p107) target = $region12
    $region11: #{pallas_l2norm.1} parent=5 // pred_region
      %s111 = ssub.s32 %s8, 1
      // Predicated region
      $region13: #{pallas_l2norm.1} parent=11 // pred_check
        %p112 = pneg %p69
      $region14: #{pallas_l2norm.1} parent=11 // pred_check_branch
        %114 = sbr.rel (%p112) target = $region16
      $region15: #{pallas_l2norm.1} parent=11 // pred_region
        _
      $region16: #{pallas_l2norm.1} parent=11 // pred_fallthru
        _
    $region12: #{pallas_l2norm.1} parent=5 // pred_fallthru
      _
    %p115 = scmp.lt.s32.totalorder %s8, 2
    // Predicated region
    $region17: #{pallas_l2norm.1} parent=5 // pred_check
      %p116 = pneg %p115
    $region18: #{pallas_l2norm.1} parent=5 // pred_check_branch
      %118 = sbr.rel (%p116) target = $region20
    $region19: #{pallas_l2norm.1} parent=5 // pred_region
      // Predicated region
      $region21: #{pallas_l2norm.1} parent=19 // pred_check
        %p119 = pneg %p42
      $region22: #{pallas_l2norm.1} parent=19 // pred_check_branch
        %121 = sbr.rel (%p119) target = $region24
      $region23: #{pallas_l2norm.1} parent=19 // pred_region
        %s122 = smul.u32 2, %s16
        %p123 = scmp.lt.s32.totalorder %s15, 1
        %s124 = scalar_select %p123, %s15, 1
        %p125 = scmp.lt.s32.totalorder %s122, 1
        %s126 = scalar_select %p125, %s122, 1
        %s127 = smul.addr %s124, 2
        %s128 = sadd.s32 %s126, %s127
        %s129 = smul.addr %s128, 4
        %s130 = scalar_lea.vmem %s0, %s129
        %s131 = smul.u32 2, %s16
      $region24: #{pallas_l2norm.1} parent=19 // pred_fallthru
        _
    $region20: #{pallas_l2norm.1} parent=5 // pred_fallthru
      _
    %p132 = scmp.le.s32.totalorder 1, %s8
    %p133 = scmp.lt.s32.totalorder %s8, 3
    %p134 = pnand %p132, %p133
    %p135 = pneg %p134
    // Predicated region
    $region25: #{pallas_l2norm.1} parent=5 // pred_check
      _
    $region26: #{pallas_l2norm.1} parent=5 // pred_check_branch
      %137 = sbr.rel (%p134) target = $region28
    $region27: #{pallas_l2norm.1} parent=5 // pred_region
      %s138 = ssub.s32 %s8, 1
      %s139 = smul.u32 2, %s18
      %p140 = scmp.lt.s32.totalorder %s17, 1
      %s141 = scalar_select %p140, %s17, 1
      %p142 = scmp.lt.s32.totalorder %s139, 1
      %s143 = scalar_select %p142, %s139, 1
      %s144 = smul.addr %s141, 2
      %s145 = sadd.s32 %s143, %s144
      %s146 = smul.addr %s145, 4
      %s147 = scalar_lea.vmem %s0, %s146
      %p148 = pneg %p48
      %p149 = pneg %p45
      %p150 = pneg %p69
      %p151 = pneg %p66
      %p152 = pneg %p97
      %p153 = pneg %p94
      %s154 = smul.u32 2, %s18
      %p155 = scmp.lt.s32.totalorder %s17, 1
      %s156 = scalar_select %p155, %s17, 1
      %p157 = scmp.lt.s32.totalorder %s154, 1
      %s158 = scalar_select %p157, %s154, 1
      %s159 = smul.addr %s156, 2
      %s160 = sadd.s32 %s158, %s159
      %s161 = smul.addr %s160, 4
      %s162 = scalar_lea.vmem %s2, %s161
      %s163 = smul.u32 2, %s18
      %p164 = scmp.lt.s32.totalorder %s17, 1
      %s165 = scalar_select %p164, %s17, 1
      %p166 = scmp.lt.s32.totalorder %s163, 1
      %s167 = scalar_select %p166, %s163, 1
      %s168 = smul.addr %s165, 2
      %s169 = sadd.s32 %s167, %s168
      %s170 = smul.addr %s169, 4
      %s171 = scalar_lea.vmem %s0, %s170
      %s172 = smul.u32 2, %s18
      %s173 = smul.u32 2, %s18
      %p174 = scmp.lt.s32.totalorder %s17, 1
      %s175 = scalar_select %p174, %s17, 1
      %p176 = scmp.lt.s32.totalorder %s173, 1
      %s177 = scalar_select %p176, %s173, 1
      %s178 = smul.addr %s175, 2
      %s179 = sadd.s32 %s177, %s178
      %s180 = smul.addr %s179, 4
      %s181 = scalar_lea.vmem %s2, %s180
      %s182 = smul.u32 2, %s18
      %v183 = vld [vmem:[%s171] sm:$0xff]
      %v184 = vmul.f32 %v183, %v183
      %v186 = vcombine.high %v184, %v184
      %vm188 = vcmask 1043456
      %v189 = vsel %vm188, %v184, 0.0
      %v190 = vrot.slane %v189, 4
      %v191 = vadd.f32 %v189, %v190
      %v192 = vrot.slane %v191, 2
      %v193 = vadd.f32 %v191, %v192
      %v194 = vrot.slane %v193, 1
      %v195 = vadd.f32 %v193, %v194
      %v196 = vsel %vm188, %v186, 0.0
      %v197 = vrot.slane %v196, 4
      %v198 = vadd.f32 %v196, %v197
      %v199 = vrot.slane %v198, 2
      %v200 = vadd.f32 %v198, %v199
      %v201 = vrot.slane %v200, 1
      %v202 = vadd.f32 %v200, %v201
      %v203 = vadd.f32 %v195, 0.0
      %v204 = vadd.f32 %v202, 0.0
      %v205 = vrsqrt.pop %v203
      %v206 = vrsqrt.pop %v204
      %v209 = vcombine.low %v205, %v206
      %v211 = vmul.f32 %v183, %v209
      %v212 = vld [vmem:[%s1] sm:$0xf]
      %214 = vset.pattern.permute.xlu0 0
      %215 = vperm.xlu0 %214, %v212
      %v216 = vpop.permute.xlu0 %215
      %v218 = vunpack.c.l.s4 839922192
      %v219 = vunpack.c.0.s8 %v218
      %v220 = vlaneseq
      %v221 = vshrl.u32 %v220, 7
      %v222 = vsub.s32 %v219, %v221
      %v223 = vrot.slane %v216, %v222
      %v225 = vmul.f32 %v211, %v223
      %226 = vst [vmem:[%s181] sm:$0xff] %v225
      %s227 = smul.u32 2, %s18
      %p228 = scmp.lt.s32.totalorder %s17, 1
      %s229 = scalar_select %p228, %s17, 1
      %p230 = scmp.lt.s32.totalorder %s227, 1
      %s231 = scalar_select %p230, %s227, 1
      %s232 = smul.addr %s229, 2
      %s233 = sadd.s32 %s231, %s232
      %s234 = smul.addr %s233, 4
      %s235 = scalar_lea.vmem %s2, %s234
      // Predicated region
      $region29: #{pallas_l2norm.1} parent=27 // pred_check
        %p236 = pneg %p94
      $region30: #{pallas_l2norm.1} parent=27 // pred_check_branch
        %238 = sbr.rel (%p236) target = $region32
      $region31: #{pallas_l2norm.1} parent=27 // pred_region
        %s239 = smul.u32 2, %s18
      $region32: #{pallas_l2norm.1} parent=27 // pred_fallthru
        _
    $region28: #{pallas_l2norm.1} parent=5 // pred_fallthru
      _
    %p240 = scmp.le.s32.totalorder 2, %s8
    // Predicated region
    $region33: #{pallas_l2norm.1} parent=5 // pred_check
      %p241 = pneg %p240
    $region34: #{pallas_l2norm.1} parent=5 // pred_check_branch
      %243 = sbr.rel (%p241) target = $region36
    $region35: #{pallas_l2norm.1} parent=5 // pred_region
      %s244 = ssub.s32 %s8, 2
      // Predicated region
      $region37: #{pallas_l2norm.1} parent=35 // pred_check
        %p245 = pneg %p100
      $region38: #{pallas_l2norm.1} parent=35 // pred_check_branch
        %247 = sbr.rel (%p245) target = $region40
      $region39: #{pallas_l2norm.1} parent=35 // pred_region
        %s248 = smul.u32 2, %s20
        %p249 = scmp.lt.s32.totalorder %s19, 1
        %s250 = scalar_select %p249, %s19, 1
        %p251 = scmp.lt.s32.totalorder %s248, 1
        %s252 = scalar_select %p251, %s248, 1
        %s253 = smul.addr %s250, 2
        %s254 = sadd.s32 %s252, %s253
        %s255 = smul.addr %s254, 4
        %s256 = scalar_lea.vmem %s2, %s255
      $region40: #{pallas_l2norm.1} parent=35 // pred_fallthru
        _
    $region36: #{pallas_l2norm.1} parent=5 // pred_fallthru
      _
  $region6: #{pallas_l2norm.1} parent=0 // loop_footer
    %s12 = sadd.s32 1, %s8
  $region7: #{pallas_l2norm.1} parent=0 // loop_footer_branch
    %7 = sbr.rel target = $region3
  $region8: #{pallas_l2norm.1} parent=0 // loop_exit
    _

</llo_original>
